<compile_context>
chip_gen: v7x
topology: tpu7x:2x2x1
jax: 0.10.0
libtpu: 0.0.40
codegen_flags: <defaults>
</compile_context>

<pallas_src>
import functools

import jax
import jax.numpy as jnp
from jax.experimental import pallas as pl
from jax.experimental.pallas import tpu as pltpu


def _label_smooth_kernel(pred_ref, tgt_ref, out_ref, *, eps, n_rows, row_tile,
                         mask_rows):
    x = pred_ref[...].astype(jnp.float32)             # (RT, V)
    t = tgt_ref[...]                                   # (RT, 1) int32
    v = x.shape[-1]

    # log-sum-exp (every reduced quantity is (RT, 1)).
    m = jnp.max(x, axis=-1, keepdims=True)
    sumexp = jnp.sum(jnp.exp(x - m), axis=-1, keepdims=True)
    lse = jnp.log(sumexp) + m

    # Single weighted reduction: w = eps/V + (1-eps)*[col == target].
    col = jax.lax.broadcasted_iota(jnp.int32, x.shape, 1)
    w_on = jnp.float32(1.0 - eps + eps / v)
    w_off = jnp.float32(eps / v)
    w = jnp.where(col == t, w_on, w_off)
    wx = jnp.sum(w * x, axis=-1, keepdims=True)

    # sum(w) == 1 exactly, so the smoothed NLL collapses to lse - sum(w*x).
    per_row = lse - wx

    if mask_rows:
        # Zero any tail rows of a partial last block (garbage reads) before
        # they reach the output / epilogue sum.
        row0 = pl.program_id(0) * row_tile
        rows = row0 + jax.lax.broadcasted_iota(jnp.int32, per_row.shape, 0)
        per_row = jnp.where(rows < n_rows, per_row, jnp.float32(0.0))

    out_ref[...] = per_row


# ~2 MiB f32 logits tile: already ~85% of HBM roofline (per-step overhead is
# only ~0.35 us) while staying far below VMEM limits on v5e/v6e/v7x.
_TILE_BYTES = 2 * 1024 * 1024


def _choose_row_tile(n, v):
    max_rows = (_TILE_BYTES // (v * 4)) // 8 * 8
    max_rows = max(8, max_rows)
    needed = ((n + 7) // 8) * 8
    return int(max(8, min(max_rows, needed)))


def label_smooth_loss(predicts, targets, eps=0.1, row_tile=None):
    """predicts: [B, T, V] float, targets: [B, T] int -> scalar f32 loss."""
    b, t, v = predicts.shape
    n = b * t
    pred2d = predicts.reshape(n, v)                    # keep input dtype
    tgt2d = targets.reshape(n, 1).astype(jnp.int32)

    if row_tile is None:
        row_tile = _choose_row_tile(n, v)

    num_blocks = pl.cdiv(n, row_tile)

    kernel = functools.partial(
        _label_smooth_kernel,
        eps=float(eps),
        n_rows=n,
        row_tile=row_tile,
        mask_rows=(n % row_tile != 0),
    )

    per_row = pl.pallas_call(
        kernel,
        out_shape=jax.ShapeDtypeStruct((n, 1), jnp.float32),
        grid_spec=pltpu.PrefetchScalarGridSpec(
            num_scalar_prefetch=0,
            grid=(num_blocks,),
            in_specs=[
                pl.BlockSpec((row_tile, v), lambda i: (i, 0)),
                pl.BlockSpec((row_tile, 1), lambda i: (i, 0)),
            ],
            out_specs=pl.BlockSpec((row_tile, 1), lambda i: (i, 0)),
        ),
        compiler_params=pltpu.CompilerParams(
            dimension_semantics=("parallel",),
            vmem_limit_bytes=48 * 1024 * 1024,
        ),
    )(pred2d, tgt2d)

    # Tiny epilogue (n f32 values): mean of per-row losses.
    return jnp.sum(per_row) / jnp.float32(n)


def _reference(predicts, targets, eps=0.1):
    v = predicts.shape[-1]
    p = predicts.reshape(-1, v).astype(jnp.float32)
    t = targets.reshape(-1)
    one_hot = jax.nn.one_hot(t, v, dtype=jnp.float32)
    one_hot = one_hot * (1 - eps) + eps / v
    logp = jax.nn.log_softmax(p, axis=-1)
    return jnp.mean(jnp.sum(-one_hot * logp, axis=1))


if __name__ == "__main__":
    key = jax.random.PRNGKey(0)

    # Case 1: rows divide the tile exactly.
    k1, k2, k3, k4 = jax.random.split(key, 4)
    B, T, V = 2, 8, 512
    predicts = jax.random.normal(k1, (B, T, V), dtype=jnp.float32)
    targets = jax.random.randint(k2, (B, T), 0, V, dtype=jnp.int32)
    loss = jax.block_until_ready(label_smooth_loss(predicts, targets, eps=0.1))
    ref = _reference(predicts, targets, eps=0.1)
    assert jnp.allclose(loss, ref, rtol=1e-4, atol=1e-5), (loss, ref)

    # Case 2: row count not a multiple of the tile (exercises the partial
    # last block + in-kernel row mask instead of a padded HBM copy).
    B2, T2 = 3, 5
    predicts2 = jax.random.normal(k3, (B2, T2, V), dtype=jnp.float32)
    targets2 = jax.random.randint(k4, (B2, T2), 0, V, dtype=jnp.int32)
    loss2 = jax.block_until_ready(label_smooth_loss(predicts2, targets2, eps=0.1))
    ref2 = _reference(predicts2, targets2, eps=0.1)
    assert jnp.allclose(loss2, ref2, rtol=1e-4, atol=1e-5), (loss2, ref2)

    print("KERNEL_OK")
</pallas_src>

<mosaic_0001>
module attributes {stable_mosaic.version = 11 : i64} {
  func.func @_label_smooth_kernel(%arg0: i32, %arg1: memref<16x512xf32, #tpu.memory_space<vmem>>, %arg2: memref<16x1xi32, #tpu.memory_space<vmem>>, %arg3: memref<16x1xf32, #tpu.memory_space<vmem>>) attributes {dimension_semantics = [#tpu.dimension_semantics<parallel>], iteration_bounds = array<i64: 1>, scalar_prefetch = 0 : i64, scratch_operands = 0 : i64, tpu.core_type = #tpu.core_type<tc>, window_params = [{transform_indices = @transform_0, window_bounds = array<i64: 16, 512>}, {transform_indices = @transform_1, window_bounds = array<i64: 16, 1>}, {transform_indices = @transform_2, window_bounds = array<i64: 16, 1>}]} {
    %c0 = arith.constant 0 : index
    %c0_0 = arith.constant 0 : index
    %0 = vector.load %arg1[%c0, %c0_0] : memref<16x512xf32, #tpu.memory_space<vmem>>, vector<16x512xf32>
    %c0_1 = arith.constant 0 : index
    %c0_2 = arith.constant 0 : index
    %1 = vector.load %arg2[%c0_1, %c0_2] : memref<16x1xi32, #tpu.memory_space<vmem>>, vector<16x1xi32>
    %cst = arith.constant dense<0xFF800000> : vector<16xf32>
    %2 = vector.multi_reduction <maximumf>, %0, %cst [1] : vector<16x512xf32> to vector<16xf32>
    %3 = vector.shape_cast %2 : vector<16xf32> to vector<16x1xf32>
    %4 = vector.broadcast %3 : vector<16x1xf32> to vector<16x512xf32>
    %5 = arith.subf %0, %4 : vector<16x512xf32>
    %6 = math.exp %5 : vector<16x512xf32>
    %cst_3 = arith.constant dense<0.000000e+00> : vector<16xf32>
    %7 = vector.multi_reduction <add>, %6, %cst_3 [1] : vector<16x512xf32> to vector<16xf32>
    %8 = vector.shape_cast %7 : vector<16xf32> to vector<16x1xf32>
    %9 = math.log %8 : vector<16x1xf32>
    %10 = arith.addf %9, %3 : vector<16x1xf32>
    %11 = tpu.iota {dimensions = array<i32: 1>} : vector<16x512xi32>
    %12 = vector.broadcast %1 : vector<16x1xi32> to vector<16x512xi32>
    %13 = arith.cmpi eq, %11, %12 : vector<16x512xi32>
    %cst_4 = arith.constant 0.9001953 : f32
    %cst_5 = arith.constant 1.95312503E-4 : f32
    %14 = vector.broadcast %cst_4 : f32 to vector<16x512xf32>
    %15 = vector.broadcast %cst_5 : f32 to vector<16x512xf32>
    %16 = arith.select %13, %14, %15 : vector<16x512xi1>, vector<16x512xf32>
    %17 = arith.mulf %16, %0 : vector<16x512xf32>
    %cst_6 = arith.constant dense<0.000000e+00> : vector<16xf32>
    %18 = vector.multi_reduction <add>, %17, %cst_6 [1] : vector<16x512xf32> to vector<16xf32>
    %19 = vector.shape_cast %18 : vector<16xf32> to vector<16x1xf32>
    %20 = arith.subf %10, %19 : vector<16x1xf32>
    %c0_7 = arith.constant 0 : index
    %c0_8 = arith.constant 0 : index
    %21 = vector.load %arg3[%c0_7, %c0_8] : memref<16x1xf32, #tpu.memory_space<vmem>>, vector<16x1xf32>
    tpu.vector_store %arg3[%c0_7, %c0_8], %20 {strides = array<i32>} : memref<16x1xf32, #tpu.memory_space<vmem>>, vector<16x1xf32>,
    return
  }
  func.func @transform_0(%arg0: i32) -> (i32, i32) {
    %c0_i32 = arith.constant 0 : i32
    %c0_i32_0 = arith.constant 0 : i32
    return %arg0, %c0_i32 : i32, i32
  }
  func.func @transform_1(%arg0: i32) -> (i32, i32) {
    %c0_i32 = arith.constant 0 : i32
    %c0_i32_0 = arith.constant 0 : i32
    return %arg0, %c0_i32 : i32, i32
  }
  func.func @transform_2(%arg0: i32) -> (i32, i32) {
    %c0_i32 = arith.constant 0 : i32
    %c0_i32_0 = arith.constant 0 : i32
    return %arg0, %c0_i32 : i32, i32
  }
}

</mosaic_0001>

<llo_original>
// kernel: tpu_custom_call.1
$region0: #{tpu_custom_call.1}
  #allocation0 [shape = 'u32[]', space=smem, size = 0x4, offset = 0x4, fixed_abs, tag = 'smem constant byte address 0x4 - core index']
  #allocation1 [shape = 'u32[144,128]{1,0:T(1,128)}', space=vmem, size = 0x12000, scoped, tag = 'internal scratch']
  %s0 = inlined_call_operand.hbm [shape: f32[16,512], index: 0, kind: input, shape index: {}]
  %s1 = inlined_call_operand.vmem [shape: s32[16,1], index: 1, kind: input, shape index: {}]
  %s2 = inlined_call_operand.vmem [shape: f32[16,1], index: 2, kind: output, shape index: {}]
  %s3 = sld [smem:[#allocation0]]
  $region22: #{tpu_custom_call.1} parent=0
    _
  %s5 = ssub.s32 1, %s3
  %s6 = scalar_select 0, %s5, %s3
  $region1: #{tpu_custom_call.1} parent=0
    #allocation2 [shape = 'u8[32768]{0}', space=vmem, size = 0x8000, scoped, tag = 'input window, operand 0, single buffered']
    #allocation3 [shape = 's32[1]{0}', space=sflag, size = 0x4, scoped, tag = 'scoped memory for tpu_custom_call.1']
    %7 = vsyncpa [#allocation3], 0
    // Predicated region
    $region2: #{tpu_custom_call.1} parent=1 // pred_check
      _
    $region3: #{tpu_custom_call.1} parent=1 // pred_check_branch
      %9 = sbr.rel (0) target = $region5
    $region4: #{tpu_custom_call.1} parent=1 // pred_region
      %s11 = ssub.s32 1024, 1024
      %12 = vsyncadd [#allocation3], %s11
      %s13 = sshll.u32 [#allocation2], 4
      %s14 = int_to_ptr.vmem [resolvable:$true] %s13
      %19 = dma.hbm_to_vmem [thread:$0]  %s0, 1024, %s14, [#allocation3], 512, 512, 32
    $region5: #{tpu_custom_call.1} parent=1 // pred_fallthru
      _
    // Predicated region
    $region6: #{tpu_custom_call.1} parent=1 // pred_check
      _
    $region7: #{tpu_custom_call.1} parent=1 // pred_check_branch
      %21 = sbr.rel (0) target = $region9
    $region8: #{tpu_custom_call.1} parent=1 // pred_region
      _
    $region9: #{tpu_custom_call.1} parent=1 // pred_fallthru
      _
    // Predicated region
    $region10: #{tpu_custom_call.1} parent=1 // pred_check
      _
    $region11: #{tpu_custom_call.1} parent=1 // pred_check_branch
      %23 = sbr.rel (0) target = $region13
    $region12: #{tpu_custom_call.1} parent=1 // pred_region
      %24 = dma.done [#allocation3], 1024
    $region13: #{tpu_custom_call.1} parent=1 // pred_fallthru
      _
    %v25 = vld [vmem:[#allocation2] sm:$0xff]
    %v26 = vld [vmem:[#allocation2 + $0x8] sm:$0xff]
    %v27 = vld [vmem:[#allocation2 + $0x10] sm:$0xff]
    %v28 = vld [vmem:[#allocation2 + $0x18] sm:$0xff]
    %v29 = vld [vmem:[#allocation2 + $0x20] sm:$0xff]
    %v30 = vld [vmem:[#allocation2 + $0x28] sm:$0xff]
    %v31 = vld [vmem:[#allocation2 + $0x30] sm:$0xff]
    %v32 = vld [vmem:[#allocation2 + $0x38] sm:$0xff]
    %v33 = vld [vmem:[%s1] sm:$0xff]
    %v34 = vld [vmem:[%s1 + $0x8] sm:$0xff]
    %v35 = vmax.f32 %v25, %v27
    %v36 = vmax.f32 %v26, %v28
    %v37 = vmax.f32 %v35, %v36
    %38 = vmax.xlane.f32.xlu0 %v37
    %v39 = vpop.xlane.xlu0 %38
    %v40 = vmax.f32 %v29, %v31
    %v41 = vmax.f32 %v30, %v32
    %v42 = vmax.f32 %v40, %v41
    %43 = vmax.xlane.f32.xlu0 %v42
    %v44 = vpop.xlane.xlu0 %43
    %v45 = vsub.f32 %v25, %v39
    %v46 = vsub.f32 %v26, %v39
    %v47 = vsub.f32 %v27, %v39
    %v48 = vsub.f32 %v28, %v39
    %v49 = vsub.f32 %v29, %v44
    %v50 = vsub.f32 %v30, %v44
    %v51 = vsub.f32 %v31, %v44
    %v52 = vsub.f32 %v32, %v44
    %v53 = vmul.f32 %v45, 1.442695
    %v54 = vpow.pop %v53
    %v55 = vmul.f32 %v46, 1.442695
    %v56 = vpow.pop %v55
    %v57 = vmul.f32 %v47, 1.442695
    %v58 = vpow.pop %v57
    %v59 = vmul.f32 %v48, 1.442695
    %v60 = vpow.pop %v59
    %v61 = vmul.f32 %v49, 1.442695
    %v62 = vpow.pop %v61
    %v63 = vmul.f32 %v50, 1.442695
    %v64 = vpow.pop %v63
    %v65 = vmul.f32 %v51, 1.442695
    %v66 = vpow.pop %v65
    %v67 = vmul.f32 %v52, 1.442695
    %v68 = vpow.pop %v67
    %v69 = vadd.f32 %v54, %v56
    %v70 = vadd.f32 %v69, %v58
    %v71 = vadd.f32 %v70, %v60
    %72 = vadd.xlane.f32.xlu0 %v71
    %v73 = vpop.xlane.xlu0 %72
    %v74 = vadd.f32 %v62, %v64
    %v75 = vadd.f32 %v74, %v66
    %v76 = vadd.f32 %v75, %v68
    %77 = vadd.xlane.f32.xlu0 %v76
    %v78 = vpop.xlane.xlu0 %77
    %v79 = vlog2.pop %v73
    %v80 = vmul.f32 %v79, 0.6931472
    %v81 = vlog2.pop %v78
    %v82 = vmul.f32 %v81, 0.6931472
    %v83 = vadd.f32 %v80, %v39
    %v84 = vadd.f32 %v82, %v44
    %v85 = vlaneseq
    %v86 = vand.u32 %v85, 127
    %v87 = vadd.s32 %v86, 128
    %v88 = vadd.s32 %v86, 256
    %v89 = vadd.s32 %v86, 384
    %90 = vset.pattern.permute.xlu0 0
    %91 = vperm.xlu0 %90, %v33
    %v92 = vpop.permute.xlu0 %91
    %93 = vset.pattern.permute.xlu0 0
    %94 = vperm.xlu0 %93, %v34
    %v95 = vpop.permute.xlu0 %94
    %vm96 = vcmp.eq.s32.totalorder %v86, %v92
    %vm97 = vcmp.eq.s32.totalorder %v87, %v92
    %vm98 = vcmp.eq.s32.totalorder %v88, %v92
    %vm99 = vcmp.eq.s32.totalorder %v89, %v92
    %vm100 = vcmp.eq.s32.totalorder %v86, %v95
    %vm101 = vcmp.eq.s32.totalorder %v87, %v95
    %vm102 = vcmp.eq.s32.totalorder %v88, %v95
    %vm103 = vcmp.eq.s32.totalorder %v89, %v95
    %v104 = vsel %vm96, 0.9001953, 0.0001953125
    %v105 = vsel %vm97, 0.9001953, 0.0001953125
    %v106 = vsel %vm98, 0.9001953, 0.0001953125
    %v107 = vsel %vm99, 0.9001953, 0.0001953125
    %v108 = vsel %vm100, 0.9001953, 0.0001953125
    %v109 = vsel %vm101, 0.9001953, 0.0001953125
    %v110 = vsel %vm102, 0.9001953, 0.0001953125
    %v111 = vsel %vm103, 0.9001953, 0.0001953125
    %v112 = vmul.f32 %v104, %v25
    %v113 = vmul.f32 %v105, %v26
    %v114 = vmul.f32 %v106, %v27
    %v115 = vmul.f32 %v107, %v28
    %v116 = vmul.f32 %v108, %v29
    %v117 = vmul.f32 %v109, %v30
    %v118 = vmul.f32 %v110, %v31
    %v119 = vmul.f32 %v111, %v32
    %v120 = vadd.f32 %v112, %v113
    %v121 = vadd.f32 %v120, %v114
    %v122 = vadd.f32 %v121, %v115
    %123 = vadd.xlane.f32.xlu0 %v122
    %v124 = vpop.xlane.xlu0 %123
    %v125 = vadd.f32 %v116, %v117
    %v126 = vadd.f32 %v125, %v118
    %v127 = vadd.f32 %v126, %v119
    %128 = vadd.xlane.f32.xlu0 %v127
    %v129 = vpop.xlane.xlu0 %128
    %v130 = vsub.f32 %v83, %v124
    %v131 = vsub.f32 %v84, %v129
    %vm132 = vcmask 7168
    %133 = vst.msk [vmem:[%s2] sm:$0xff] %vm132, %v130
    %134 = vst.msk [vmem:[%s2 + $0x8] sm:$0xff] %vm132, %v131
    // Predicated region
    $region14: #{tpu_custom_call.1} parent=1 // pred_check
      _
    $region15: #{tpu_custom_call.1} parent=1 // pred_check_branch
      %136 = sbr.rel (0) target = $region17
    $region16: #{tpu_custom_call.1} parent=1 // pred_region
      _
    $region17: #{tpu_custom_call.1} parent=1 // pred_fallthru
      _
    // Predicated region
    $region18: #{tpu_custom_call.1} parent=1 // pred_check
      _
    $region19: #{tpu_custom_call.1} parent=1 // pred_check_branch
      %138 = sbr.rel (0) target = $region21
    $region20: #{tpu_custom_call.1} parent=1 // pred_region
      _
    $region21: #{tpu_custom_call.1} parent=1 // pred_fallthru
      _
    %139 = vsyncpa [#allocation3], 1

</llo_original>
